<compile_context>
chip_gen: v7x
topology: tpu7x:2x2x1
jax: 0.10.0
libtpu: 0.0.40
codegen_flags: <defaults>
</compile_context>

<pallas_src>
import jax
import jax.numpy as jnp
from jax.experimental import pallas as pl
from jax.experimental.pallas import tpu as pltpu


def slstm_kernel(xh_ref, cmn_ref, w_ref, b_ref, out_ref):
    """Fused single-matmul SLSTM cell step.

    xh_ref:  (Bp, input_size + hidden)       [x | h]          (matmul dtype)
    cmn_ref: (Bp, 3*hidden) f32              [c | m | n]
    w_ref:   (input_size + hidden, 4*hidden) [W_i ; block_diag(W_h)]
    b_ref:   (1, 4*hidden) f32               b_i + b_h (pre-summed)
    out_ref: (Bp, 4*hidden) f32              [h_next | c_next | m_next | n_next]
    """
    H = out_ref.shape[-1] // 4

    # One MXU matmul covers both the input and the recurrent projection;
    # accumulate in f32 regardless of the input dtype.
    pre = (jnp.dot(xh_ref[...], w_ref[...], preferred_element_type=jnp.float32)
           + b_ref[...])

    i_t = pre[:, 0 * H:1 * H]
    f_t = pre[:, 1 * H:2 * H]
    z_t = pre[:, 2 * H:3 * H]
    o_t = pre[:, 3 * H:4 * H]

    c = cmn_ref[:, 0 * H:1 * H]
    m = cmn_ref[:, 1 * H:2 * H]
    n = cmn_ref[:, 2 * H:3 * H]

    # Gate math stays in f32 (VPU + EUP), independent of the matmul dtype.
    m_next = jnp.maximum(f_t + m, i_t)
    i = jnp.exp(i_t - m_next)
    f = jnp.exp(f_t - m_next + m)
    z = jnp.tanh(z_t)
    o = jax.nn.sigmoid(o_t)

    c_next = f * c + i * z
    n_next = f * n + i
    # EUP approximate reciprocal instead of a full-precision divide.
    h_next = o * c_next * pl.reciprocal(n_next, approx=True)

    # Single lane-dense 4*hidden output slab; each store is 128-lane aligned
    # and full-sublane (batch padded to 8), so all stores are unmasked.
    out_ref[:, 0 * H:1 * H] = h_next
    out_ref[:, 1 * H:2 * H] = c_next
    out_ref[:, 2 * H:3 * H] = m_next
    out_ref[:, 3 * H:4 * H] = n_next


def slstm_cell(x, h, c, m, n, W_i, b_i, W_h_blocks, b_h, *,
               matmul_dtype=jnp.float32):
    """Pallas SLSTM cell. W_h_blocks: (num_heads, head_size, 4*head_size).

    matmul_dtype=jnp.bfloat16 enables the v6e/v7x fast-MXU path (f32 accumulate,
    f32 gate math); default f32 matches the PyTorch reference bit-for-bit-ish.
    """
    B, _ = x.shape
    hidden = h.shape[-1]
    num_heads, head_size, _ = W_h_blocks.shape
    assert hidden == num_heads * head_size

    # ---- glue (in real use this is parameter prep, done once, not per step) ----
    W_h_full = jax.scipy.linalg.block_diag(
        *[W_h_blocks[k] for k in range(num_heads)])
    W = jnp.concatenate([W_i, W_h_full], axis=0).astype(matmul_dtype)  # (in+hid, 4*hid)
    b = (b_i + b_h).reshape(1, -1).astype(jnp.float32)                 # pre-summed bias

    # Pad batch to a multiple of 8 sublanes (unmasked loads/stores).
    Bp = max(8, ((B + 7) // 8) * 8)
    pad = Bp - B

    def _pad(a):
        return jnp.pad(a, ((0, pad), (0, 0))) if pad else a

    xh = _pad(jnp.concatenate([x, h], axis=-1).astype(matmul_dtype))          # (Bp, in+hid)
    cmn = _pad(jnp.concatenate([c, m, n], axis=-1).astype(jnp.float32))       # (Bp, 3*hid)

    # Whole problem is one VMEM-resident block (< 1 MiB); no grid needed.
    # TODO(synk): for large fused batch/time, add a leading "parallel" grid axis
    #   over rows so both v7x TensorCores get work.
    out = pl.pallas_call(
        slstm_kernel,
        out_shape=jax.ShapeDtypeStruct((Bp, 4 * hidden), jnp.float32),
        in_specs=[pl.BlockSpec(memory_space=pltpu.VMEM)] * 4,
        out_specs=pl.BlockSpec(memory_space=pltpu.VMEM),
    )(xh, cmn, W, b)

    h_next = out[:B, 0 * hidden:1 * hidden]
    c_next = out[:B, 1 * hidden:2 * hidden]
    m_next = out[:B, 2 * hidden:3 * hidden]
    n_next = out[:B, 3 * hidden:4 * hidden]
    return h_next, c_next, m_next, n_next


def slstm_ref(x, h, c, m, n, W_i, b_i, W_h_blocks, b_h):
    """Pure-JAX reference mirroring the PyTorch forward."""
    W_h_full = jax.scipy.linalg.block_diag(
        *[W_h_blocks[k] for k in range(W_h_blocks.shape[0])])
    pre = x @ W_i + b_i + h @ W_h_full + b_h
    i_t, f_t, z_t, o_t = jnp.split(pre, 4, axis=-1)
    m_next = jnp.maximum(f_t + m, i_t)
    i = jnp.exp(i_t - m_next)
    f = jnp.exp(f_t - m_next + m)
    z = jnp.tanh(z_t)
    o = jax.nn.sigmoid(o_t)
    c_next = f * c + i * z
    n_next = f * n + i
    h_next = o * (c_next / n_next)
    return h_next, c_next, m_next, n_next


def xavier_normal(key, shape):
    fan_in, fan_out = shape[-2], shape[-1]
    std = jnp.sqrt(2.0 / (fan_in + fan_out))
    return std * jax.random.normal(key, shape, dtype=jnp.float32)


if __name__ == "__main__":
    # Small, deterministic configuration.
    batch = 2
    input_size = 64
    head_size = 32
    num_heads = 4
    hidden = head_size * num_heads  # 128

    key = jax.random.PRNGKey(0)
    keys = jax.random.split(key, 8)

    # Parameters (deterministic xavier-normal weights, zero biases as in init_params).
    W_i = xavier_normal(keys[0], (input_size, hidden * 4))
    W_h_blocks = jnp.stack(
        [xavier_normal(k, (head_size, head_size * 4))
         for k in jax.random.split(keys[1], num_heads)]
    )
    b_i = jnp.zeros((hidden * 4,), jnp.float32)
    b_h = jnp.zeros((hidden * 4,), jnp.float32)

    # Inputs / state (keep n positive, matching the module's usage invariant).
    x = jax.random.normal(keys[2], (batch, input_size), dtype=jnp.float32)
    h = jax.random.normal(keys[3], (batch, hidden), dtype=jnp.float32)
    c = jax.random.normal(keys[4], (batch, hidden), dtype=jnp.float32)
    m = jax.random.normal(keys[5], (batch, hidden), dtype=jnp.float32)
    n = jax.random.normal(keys[6], (batch, hidden), dtype=jnp.float32) ** 2 + 1.0

    ref = slstm_ref(x, h, c, m, n, W_i, b_i, W_h_blocks, b_h)

    # f32 matmul path (reference-accurate; only h uses the approx reciprocal).
    out = slstm_cell(x, h, c, m, n, W_i, b_i, W_h_blocks, b_h)
    out = jax.block_until_ready(out)
    assert jnp.allclose(out[0], ref[0], atol=1e-2, rtol=1e-2), "h mismatch"
    for a, b in zip(out[1:], ref[1:]):
        assert jnp.allclose(a, b, atol=1e-5, rtol=1e-5), "c/m/n mismatch"

    # bf16 matmul-input path (the v6e/v7x fast-MXU option); looser tolerance.
    out_bf16 = slstm_cell(x, h, c, m, n, W_i, b_i, W_h_blocks, b_h,
                          matmul_dtype=jnp.bfloat16)
    out_bf16 = jax.block_until_ready(out_bf16)
    for a, b in zip(out_bf16, ref):
        assert jnp.allclose(a, b, atol=1e-1, rtol=1e-1), "bf16 path mismatch"

    print("KERNEL_OK")
</pallas_src>

<mosaic_0001>
module attributes {stable_mosaic.version = 11 : i64} {
  func.func @slstm_kernel(%arg0: memref<8x192xf32, #tpu.memory_space<vmem>>, %arg1: memref<8x384xf32, #tpu.memory_space<vmem>>, %arg2: memref<192x512xf32, #tpu.memory_space<vmem>>, %arg3: memref<1x512xf32, #tpu.memory_space<vmem>>, %arg4: memref<8x512xf32, #tpu.memory_space<vmem>>) attributes {dimension_semantics = [], scalar_prefetch = 0 : i64, scratch_operands = 0 : i64, tpu.core_type = #tpu.core_type<tc>} {
    %c0 = arith.constant 0 : index
    %c0_0 = arith.constant 0 : index
    %0 = vector.load %arg0[%c0, %c0_0] : memref<8x192xf32, #tpu.memory_space<vmem>>, vector<8x192xf32>
    %c0_1 = arith.constant 0 : index
    %c0_2 = arith.constant 0 : index
    %1 = vector.load %arg2[%c0_1, %c0_2] : memref<192x512xf32, #tpu.memory_space<vmem>>, vector<192x512xf32>
    %cst = arith.constant dense<0.000000e+00> : vector<8x512xf32>
    %2 = tpu.matmul %0, %1, %cst {dimension_numbers = #tpu.dot_dimension_numbers<[1], [0], [0], [1], [0, 0, 1, 1], [], []>} : vector<8x192xf32>, vector<192x512xf32>, vector<8x512xf32> -> vector<8x512xf32>
    %c0_3 = arith.constant 0 : index
    %c0_4 = arith.constant 0 : index
    %3 = vector.load %arg3[%c0_3, %c0_4] : memref<1x512xf32, #tpu.memory_space<vmem>>, vector<1x512xf32>
    %4 = vector.broadcast %3 : vector<1x512xf32> to vector<8x512xf32>
    %5 = arith.addf %2, %4 : vector<8x512xf32>
    %6 = vector.extract_strided_slice %5 {offsets = [0, 0], sizes = [8, 128], strides = [1, 1]} : vector<8x512xf32> to vector<8x128xf32>
    %7 = vector.extract_strided_slice %5 {offsets = [0, 128], sizes = [8, 128], strides = [1, 1]} : vector<8x512xf32> to vector<8x128xf32>
    %8 = vector.extract_strided_slice %5 {offsets = [0, 256], sizes = [8, 128], strides = [1, 1]} : vector<8x512xf32> to vector<8x128xf32>
    %9 = vector.extract_strided_slice %5 {offsets = [0, 384], sizes = [8, 128], strides = [1, 1]} : vector<8x512xf32> to vector<8x128xf32>
    %c0_5 = arith.constant 0 : index
    %c0_6 = arith.constant 0 : index
    %10 = vector.load %arg1[%c0_5, %c0_6] : memref<8x384xf32, #tpu.memory_space<vmem>>, vector<8x128xf32>
    %c0_7 = arith.constant 0 : index
    %c128 = arith.constant 128 : index
    %11 = vector.load %arg1[%c0_7, %c128] : memref<8x384xf32, #tpu.memory_space<vmem>>, vector<8x128xf32>
    %c0_8 = arith.constant 0 : index
    %c256 = arith.constant 256 : index
    %12 = vector.load %arg1[%c0_8, %c256] : memref<8x384xf32, #tpu.memory_space<vmem>>, vector<8x128xf32>
    %13 = arith.addf %7, %11 : vector<8x128xf32>
    %14 = arith.maximumf %13, %6 : vector<8x128xf32>
    %15 = arith.subf %6, %14 : vector<8x128xf32>
    %16 = math.exp %15 : vector<8x128xf32>
    %17 = arith.subf %7, %14 : vector<8x128xf32>
    %18 = arith.addf %17, %11 : vector<8x128xf32>
    %19 = math.exp %18 : vector<8x128xf32>
    %20 = math.tanh %8 : vector<8x128xf32>
    %21 = arith.negf %9 : vector<8x128xf32>
    %22 = math.exp %21 : vector<8x128xf32>
    %cst_9 = arith.constant 1.000000e+00 : f32
    %23 = vector.broadcast %cst_9 : f32 to vector<8x128xf32>
    %24 = arith.addf %23, %22 : vector<8x128xf32>
    %25 = arith.divf %23, %24 : vector<8x128xf32>
    %26 = arith.mulf %19, %10 : vector<8x128xf32>
    %27 = arith.mulf %16, %20 : vector<8x128xf32>
    %28 = arith.addf %26, %27 : vector<8x128xf32>
    %29 = arith.mulf %19, %12 : vector<8x128xf32>
    %30 = arith.addf %29, %16 : vector<8x128xf32>
    %31 = arith.mulf %25, %28 : vector<8x128xf32>
    %32 = tpu.reciprocal %30 {approx = true} : vector<8x128xf32> -> vector<8x128xf32>
    %33 = arith.mulf %31, %32 : vector<8x128xf32>
    %c0_10 = arith.constant 0 : index
    %c0_11 = arith.constant 0 : index
    %34 = vector.load %arg4[%c0_10, %c0_11] : memref<8x512xf32, #tpu.memory_space<vmem>>, vector<8x128xf32>
    tpu.vector_store %arg4[%c0_10, %c0_11], %33 {strides = array<i32>} : memref<8x512xf32, #tpu.memory_space<vmem>>, vector<8x128xf32>,
    %c0_12 = arith.constant 0 : index
    %c128_13 = arith.constant 128 : index
    %35 = vector.load %arg4[%c0_12, %c128_13] : memref<8x512xf32, #tpu.memory_space<vmem>>, vector<8x128xf32>
    tpu.vector_store %arg4[%c0_12, %c128_13], %28 {strides = array<i32>} : memref<8x512xf32, #tpu.memory_space<vmem>>, vector<8x128xf32>,
    %c0_14 = arith.constant 0 : index
    %c256_15 = arith.constant 256 : index
    %36 = vector.load %arg4[%c0_14, %c256_15] : memref<8x512xf32, #tpu.memory_space<vmem>>, vector<8x128xf32>
    tpu.vector_store %arg4[%c0_14, %c256_15], %14 {strides = array<i32>} : memref<8x512xf32, #tpu.memory_space<vmem>>, vector<8x128xf32>,
    %c0_16 = arith.constant 0 : index
    %c384 = arith.constant 384 : index
    %37 = vector.load %arg4[%c0_16, %c384] : memref<8x512xf32, #tpu.memory_space<vmem>>, vector<8x128xf32>
    tpu.vector_store %arg4[%c0_16, %c384], %30 {strides = array<i32>} : memref<8x512xf32, #tpu.memory_space<vmem>>, vector<8x128xf32>,
    return
  }
}

</mosaic_0001>

<llo_original>
// kernel: tpu_custom_call.1
$region0: #{tpu_custom_call.1}
  #allocation0 [shape = 'u32[]', space=smem, size = 0x4, offset = 0x4, fixed_abs, tag = 'smem constant byte address 0x4 - core index']
  #allocation1 [shape = 'u32[144,128]{1,0:T(1,128)}', space=vmem, size = 0x12000, scoped, tag = 'internal scratch']
  %s0 = inlined_call_operand.hbm [shape: f32[8,192], index: 0, kind: input, shape index: {}]
  %s1 = inlined_call_operand.hbm [shape: f32[8,384], index: 1, kind: input, shape index: {}]
  %s2 = inlined_call_operand.hbm [shape: f32[192,512], index: 2, kind: input, shape index: {}]
  %s3 = inlined_call_operand.vmem [shape: f32[1,512], index: 3, kind: input, shape index: {}]
  %s4 = inlined_call_operand.hbm [shape: f32[8,512], index: 4, kind: output, shape index: {}]
  %s5 = sld [smem:[#allocation0]]
  $region38: #{tpu_custom_call.1} parent=0
    _
  %s7 = ssub.s32 1, %s5
  %s8 = scalar_select 0, %s7, %s5
  $region1: #{tpu_custom_call.1} parent=0
    #allocation2 [shape = 'u8[8192]{0}', space=vmem, size = 0x2000, scoped, tag = 'input window, operand 0, single buffered']
    #allocation3 [shape = 's32[1]{0}', space=sflag, size = 0x4, scoped, tag = 'scoped memory for tpu_custom_call.1']
    #allocation4 [shape = 's32[1]{0}', space=sflag, size = 0x4, scoped, tag = 'scoped memory for tpu_custom_call.1']
    #allocation5 [shape = 'u8[12288]{0}', space=vmem, size = 0x3000, scoped, tag = 'input window, operand 1, single buffered']
    #allocation6 [shape = 's32[1]{0}', space=sflag, size = 0x4, scoped, tag = 'scoped memory for tpu_custom_call.1']
    #allocation7 [shape = 'u8[393216]{0}', space=vmem, size = 0x60000, scoped, tag = 'input window, operand 2, single buffered']
    #allocation8 [shape = 'u8[16384]{0}', space=vmem, size = 0x4000, scoped, tag = 'output window, operand 0, single buffered']
    %9 = vsyncpa [#allocation3], 0
    %10 = vsyncpa [#allocation6], 0
    %11 = vsyncpa [#allocation4], 0
    // Predicated region
    $region2: #{tpu_custom_call.1} parent=1 // pred_check
      _
    $region3: #{tpu_custom_call.1} parent=1 // pred_check_branch
      %13 = sbr.rel (0) target = $region5
    $region4: #{tpu_custom_call.1} parent=1 // pred_region
      %s15 = ssub.s32 256, 256
      %16 = vsyncadd [#allocation3], %s15
      %s18 = sshll.u32 [#allocation2], 4
      %s19 = int_to_ptr.vmem [resolvable:$true] %s18
      %21 = dma.hbm_to_vmem [thread:$0]  %s0, 256, %s19, [#allocation3]
    $region5: #{tpu_custom_call.1} parent=1 // pred_fallthru
      _
    // Predicated region
    $region6: #{tpu_custom_call.1} parent=1 // pred_check
      _
    $region7: #{tpu_custom_call.1} parent=1 // pred_check_branch
      %23 = sbr.rel (0) target = $region9
    $region8: #{tpu_custom_call.1} parent=1 // pred_region
      %s25 = ssub.s32 384, 384
      %26 = vsyncadd [#allocation6], %s25
      %s28 = sshll.u32 [#allocation5], 4
      %s29 = int_to_ptr.vmem [resolvable:$true] %s28
      %31 = dma.hbm_to_vmem [thread:$0]  %s1, 384, %s29, [#allocation6]
    $region9: #{tpu_custom_call.1} parent=1 // pred_fallthru
      _
    // Predicated region
    $region10: #{tpu_custom_call.1} parent=1 // pred_check
      _
    $region11: #{tpu_custom_call.1} parent=1 // pred_check_branch
      %33 = sbr.rel (0) target = $region13
    $region12: #{tpu_custom_call.1} parent=1 // pred_region
      %s35 = ssub.s32 12288, 12288
      %36 = vsyncadd [#allocation6], %s35
      %s37 = sshll.u32 [#allocation7], 4
      %s38 = int_to_ptr.vmem [resolvable:$true] %s37
      %43 = dma.hbm_to_vmem [thread:$0]  %s2, 12288, %s38, [#allocation6], 512, 512, 32
    $region13: #{tpu_custom_call.1} parent=1 // pred_fallthru
      _
    // Predicated region
    $region14: #{tpu_custom_call.1} parent=1 // pred_check
      _
    $region15: #{tpu_custom_call.1} parent=1 // pred_check_branch
      %45 = sbr.rel (0) target = $region17
    $region16: #{tpu_custom_call.1} parent=1 // pred_region
      _
    $region17: #{tpu_custom_call.1} parent=1 // pred_fallthru
      _
    // Predicated region
    $region18: #{tpu_custom_call.1} parent=1 // pred_check
      _
    $region19: #{tpu_custom_call.1} parent=1 // pred_check_branch
      %47 = sbr.rel (0) target = $region21
    $region20: #{tpu_custom_call.1} parent=1 // pred_region
      %48 = dma.done [#allocation3], 256
    $region21: #{tpu_custom_call.1} parent=1 // pred_fallthru
      _
    // Predicated region
    $region22: #{tpu_custom_call.1} parent=1 // pred_check
      _
    $region23: #{tpu_custom_call.1} parent=1 // pred_check_branch
      %50 = sbr.rel (0) target = $region25
    $region24: #{tpu_custom_call.1} parent=1 // pred_region
      %51 = dma.done [#allocation6], 384
    $region25: #{tpu_custom_call.1} parent=1 // pred_fallthru
      _
    // Predicated region
    $region26: #{tpu_custom_call.1} parent=1 // pred_check
      _
    $region27: #{tpu_custom_call.1} parent=1 // pred_check_branch
      %53 = sbr.rel (0) target = $region29
    $region28: #{tpu_custom_call.1} parent=1 // pred_region
      %54 = dma.done [#allocation6], 12288
    $region29: #{tpu_custom_call.1} parent=1 // pred_fallthru
      _
    %v55 = vld [vmem:[#allocation2] sm:$0xff]
    %v56 = vld [vmem:[#allocation2 + $0x8] sm:$0xff]
    %v57 = vld [vmem:[#allocation7] sm:$0xff]
    %v58 = vld [vmem:[#allocation7 + $0x8] sm:$0xff]
    %v59 = vld [vmem:[#allocation7 + $0x10] sm:$0xff]
    %v60 = vld [vmem:[#allocation7 + $0x18] sm:$0xff]
    %v61 = vld [vmem:[#allocation7 + $0x20] sm:$0xff]
    %v62 = vld [vmem:[#allocation7 + $0x28] sm:$0xff]
    %v63 = vld [vmem:[#allocation7 + $0x30] sm:$0xff]
    %v64 = vld [vmem:[#allocation7 + $0x38] sm:$0xff]
    %v65 = vld [vmem:[#allocation7 + $0x40] sm:$0xff]
    %v66 = vld [vmem:[#allocation7 + $0x48] sm:$0xff]
    %v67 = vld [vmem:[#allocation7 + $0x50] sm:$0xff]
    %v68 = vld [vmem:[#allocation7 + $0x58] sm:$0xff]
    %v69 = vld [vmem:[#allocation7 + $0x60] sm:$0xff]
    %v70 = vld [vmem:[#allocation7 + $0x68] sm:$0xff]
    %v71 = vld [vmem:[#allocation7 + $0x70] sm:$0xff]
    %v72 = vld [vmem:[#allocation7 + $0x78] sm:$0xff]
    %v73 = vld [vmem:[#allocation7 + $0x80] sm:$0xff]
    %v74 = vld [vmem:[#allocation7 + $0x88] sm:$0xff]
    %v75 = vld [vmem:[#allocation7 + $0x90] sm:$0xff]
    %v76 = vld [vmem:[#allocation7 + $0x98] sm:$0xff]
    %v77 = vld [vmem:[#allocation7 + $0xa0] sm:$0xff]
    %v78 = vld [vmem:[#allocation7 + $0xa8] sm:$0xff]
    %v79 = vld [vmem:[#allocation7 + $0xb0] sm:$0xff]
    %v80 = vld [vmem:[#allocation7 + $0xb8] sm:$0xff]
    %v81 = vld [vmem:[#allocation7 + $0xc0] sm:$0xff]
    %v82 = vld [vmem:[#allocation7 + $0xc8] sm:$0xff]
    %v83 = vld [vmem:[#allocation7 + $0xd0] sm:$0xff]
    %v84 = vld [vmem:[#allocation7 + $0xd8] sm:$0xff]
    %v85 = vld [vmem:[#allocation7 + $0xe0] sm:$0xff]
    %v86 = vld [vmem:[#allocation7 + $0xe8] sm:$0xff]
    %v87 = vld [vmem:[#allocation7 + $0xf0] sm:$0xff]
    %v88 = vld [vmem:[#allocation7 + $0xf8] sm:$0xff]
    %v89 = vld [vmem:[#allocation7 + $0x100] sm:$0xff]
    %v90 = vld [vmem:[#allocation7 + $0x108] sm:$0xff]
    %v91 = vld [vmem:[#allocation7 + $0x110] sm:$0xff]
    %v92 = vld [vmem:[#allocation7 + $0x118] sm:$0xff]
    %v93 = vld [vmem:[#allocation7 + $0x120] sm:$0xff]
    %v94 = vld [vmem:[#allocation7 + $0x128] sm:$0xff]
    %v95 = vld [vmem:[#allocation7 + $0x130] sm:$0xff]
    %v96 = vld [vmem:[#allocation7 + $0x138] sm:$0xff]
    %v97 = vld [vmem:[#allocation7 + $0x140] sm:$0xff]
    %v98 = vld [vmem:[#allocation7 + $0x148] sm:$0xff]
    %v99 = vld [vmem:[#allocation7 + $0x150] sm:$0xff]
    %v100 = vld [vmem:[#allocation7 + $0x158] sm:$0xff]
    %v101 = vld [vmem:[#allocation7 + $0x160] sm:$0xff]
    %v102 = vld [vmem:[#allocation7 + $0x168] sm:$0xff]
    %v103 = vld [vmem:[#allocation7 + $0x170] sm:$0xff]
    %v104 = vld [vmem:[#allocation7 + $0x178] sm:$0xff]
    %v105 = vld [vmem:[#allocation7 + $0x180] sm:$0xff]
    %v106 = vld [vmem:[#allocation7 + $0x188] sm:$0xff]
    %v107 = vld [vmem:[#allocation7 + $0x190] sm:$0xff]
    %v108 = vld [vmem:[#allocation7 + $0x198] sm:$0xff]
    %v109 = vld [vmem:[#allocation7 + $0x1a0] sm:$0xff]
    %v110 = vld [vmem:[#allocation7 + $0x1a8] sm:$0xff]
    %v111 = vld [vmem:[#allocation7 + $0x1b0] sm:$0xff]
    %v112 = vld [vmem:[#allocation7 + $0x1b8] sm:$0xff]
    %v113 = vld [vmem:[#allocation7 + $0x1c0] sm:$0xff]
    %v114 = vld [vmem:[#allocation7 + $0x1c8] sm:$0xff]
    %v115 = vld [vmem:[#allocation7 + $0x1d0] sm:$0xff]
    %v116 = vld [vmem:[#allocation7 + $0x1d8] sm:$0xff]
    %v117 = vld [vmem:[#allocation7 + $0x1e0] sm:$0xff]
    %v118 = vld [vmem:[#allocation7 + $0x1e8] sm:$0xff]
    %v119 = vld [vmem:[#allocation7 + $0x1f0] sm:$0xff]
    %v120 = vld [vmem:[#allocation7 + $0x1f8] sm:$0xff]
    %v121 = vld [vmem:[#allocation7 + $0x200] sm:$0xff]
    %v122 = vld [vmem:[#allocation7 + $0x208] sm:$0xff]
    %v123 = vld [vmem:[#allocation7 + $0x210] sm:$0xff]
    %v124 = vld [vmem:[#allocation7 + $0x218] sm:$0xff]
    %v125 = vld [vmem:[#allocation7 + $0x220] sm:$0xff]
    %v126 = vld [vmem:[#allocation7 + $0x228] sm:$0xff]
    %v127 = vld [vmem:[#allocation7 + $0x230] sm:$0xff]
    %v128 = vld [vmem:[#allocation7 + $0x238] sm:$0xff]
    %v129 = vld [vmem:[#allocation7 + $0x240] sm:$0xff]
    %v130 = vld [vmem:[#allocation7 + $0x248] sm:$0xff]
    %v131 = vld [vmem:[#allocation7 + $0x250] sm:$0xff]
    %v132 = vld [vmem:[#allocation7 + $0x258] sm:$0xff]
    %v133 = vld [vmem:[#allocation7 + $0x260] sm:$0xff]
    %v134 = vld [vmem:[#allocation7 + $0x268] sm:$0xff]
    %v135 = vld [vmem:[#allocation7 + $0x270] sm:$0xff]
    %v136 = vld [vmem:[#allocation7 + $0x278] sm:$0xff]
    %v137 = vld [vmem:[#allocation7 + $0x280] sm:$0xff]
    %v138 = vld [vmem:[#allocation7 + $0x288] sm:$0xff]
    %v139 = vld [vmem:[#allocation7 + $0x290] sm:$0xff]
    %v140 = vld [vmem:[#allocation7 + $0x298] sm:$0xff]
    %v141 = vld [vmem:[#allocation7 + $0x2a0] sm:$0xff]
    %v142 = vld [vmem:[#allocation7 + $0x2a8] sm:$0xff]
    %v143 = vld [vmem:[#allocation7 + $0x2b0] sm:$0xff]
    %v144 = vld [vmem:[#allocation7 + $0x2b8] sm:$0xff]
    %v145 = vld [vmem:[#allocation7 + $0x2c0] sm:$0xff]
    %v146 = vld [vmem:[#allocation7 + $0x2c8] sm:$0xff]
    %v147 = vld [vmem:[#allocation7 + $0x2d0] sm:$0xff]
    %v148 = vld [vmem:[#allocation7 + $0x2d8] sm:$0xff]
    %v149 = vld [vmem:[#allocation7 + $0x2e0] sm:$0xff]
    %v150 = vld [vmem:[#allocation7 + $0x2e8] sm:$0xff]
    %v151 = vld [vmem:[#allocation7 + $0x2f0] sm:$0xff]
    %v152 = vld [vmem:[#allocation7 + $0x2f8] sm:$0xff]
    %v153 = vld [vmem:[%s3] sm:$0xf]
    %v155 = vlaneseq
    %v156 = vshrl.u32 %v155, 7
    %v157 = vsub.s32 0, %v156
    %v158 = vrot.slane %v153, %v157
    %v159 = vlaneseq
    %v160 = vshrl.u32 %v159, 7
    %v161 = vsub.s32 1, %v160
    %v162 = vrot.slane %v153, %v161
    %v163 = vlaneseq
    %v164 = vshrl.u32 %v163, 7
    %v165 = vsub.s32 2, %v164
    %v166 = vrot.slane %v153, %v165
    %v167 = vlaneseq
    %v168 = vshrl.u32 %v167, 7
    %v169 = vsub.s32 3, %v168
    %v170 = vrot.slane %v153, %v169
    %vm175 = vcmask 523264
    %v177 = vsel %vm175, %v56, 0
    %179 = vmatprep.subr.mxu0 %v58
    %180 = vmatpush1.msra.mxu0 %v57
    %181 = vmatprep.subr.mxu0 %v62
    %182 = vmatpush1.msra.mxu0 %v61
    %183 = vmatprep.subr.mxu0 %v66
    %184 = vmatpush1.msra.mxu0 %v65
    %185 = vmatprep.subr.mxu0 %v70
    %186 = vmatpush1.msra.mxu0 %v69
    %187 = vmatprep.subr.mxu0 %v74
    %188 = vmatpush1.msra.mxu0 %v73
    %189 = vmatprep.subr.mxu0 %v78
    %190 = vmatpush1.msra.mxu0 %v77
    %191 = vmatprep.subr.mxu0 %v82
    %192 = vmatpush1.msra.mxu0 %v81
    %193 = vmatprep.subr.mxu0 %v86
    %194 = vmatpush1.msra.mxu0 %v85
    %195 = vmatprep.subr.mxu0 %v90
    %196 = vmatpush1.msra.mxu0 %v89
    %197 = vmatprep.subr.mxu0 %v94
    %198 = vmatpush1.msra.mxu0 %v93
    %199 = vmatprep.subr.mxu0 %v98
    %200 = vmatpush1.msra.mxu0 %v97
    %201 = vmatprep.subr.mxu0 %v102
    %202 = vmatpush1.msra.mxu0 %v101
    %203 = vmatprep.subr.mxu0 %v106
    %204 = vmatpush1.msra.mxu0 %v105
    %205 = vmatprep.subr.mxu0 %v110
    %206 = vmatpush1.msra.mxu0 %v109
    %207 = vmatprep.subr.mxu0 %v114
    %208 = vmatpush1.msra.mxu0 %v113
    %209 = vmatprep.subr.mxu0 %v118
    %210 = vmatpush1.msra.mxu0 %v117
    %211 = vmatprep.subr.mxu0 %v122
    %212 = vmatpush1.msra.mxu0 %v121
    %213 = vmatprep.subr.mxu0 %v126
    %214 = vmatpush1.msra.mxu0 %v125
    %215 = vmatprep.subr.mxu0 %v130
    %216 = vmatpush1.msra.mxu0 %v129
    %217 = vmatprep.subr.mxu0 %v134
    %218 = vmatpush1.msra.mxu0 %v133
    %219 = vmatprep.subr.mxu0 %v138
    %220 = vmatpush1.msra.mxu0 %v137
    %221 = vmatprep.subr.mxu0 %v142
    %222 = vmatpush1.msra.mxu0 %v141
    %223 = vmatprep.subr.mxu0 %v146
    %224 = vmatpush1.msra.mxu0 %v145
    %225 = vmatprep.subr.mxu0 %v150
    %226 = vmatpush1.msra.mxu0 %v149
    %227 = vmatprep.subr.mxu0 0.0
    %228 = vmatpush1.msra.mxu0 0.0
    %229 = vmatprep.subr.mxu0 0.0
    %230 = vmatpush1.msra.mxu0 0.0
    %231 = vmatprep.subr.mxu0 0.0
    %232 = vmatpush1.msra.mxu0 0.0
    %233 = vmatprep.subr.mxu0 0.0
    %234 = vmatpush1.msra.mxu0 0.0
    %235 = vmatprep.subr.mxu0 0.0
    %236 = vmatpush1.msra.mxu0 0.0
    %237 = vmatprep.subr.mxu0 0.0
    %238 = vmatpush1.msra.mxu0 0.0
    %239 = vmatprep.subr.mxu0 0.0
    %240 = vmatpush1.msra.mxu0 0.0
    %241 = vmatprep.subr.mxu0 0.0
    %242 = vmatpush1.msra.mxu0 0.0
    %243 = vmatprep.mubr.f32.mxu0 %v177
    %244 = vmatmul.mubr.f32.gmra.mrb[0].mxu0 %v55
    %v245 = vpop.f32.mrb[0].mxu0
    %v246 = vadd.f32 %v158, %v245
    %v247 = vpop.f32.mrb[0].mxu0
    %v248 = vadd.f32 %v162, %v247
    %249 = vdwg.mxu0
    %250 = vmatprep.subr.mxu0 %v60
    %251 = vmatpush1.msra.mxu0 %v59
    %252 = vmatprep.subr.mxu0 %v64
    %253 = vmatpush1.msra.mxu0 %v63
    %254 = vmatprep.subr.mxu0 %v68
    %255 = vmatpush1.msra.mxu0 %v67
    %256 = vmatprep.subr.mxu0 %v72
    %257 = vmatpush1.msra.mxu0 %v71
    %258 = vmatprep.subr.mxu0 %v76
    %259 = vmatpush1.msra.mxu0 %v75
    %260 = vmatprep.subr.mxu0 %v80
    %261 = vmatpush1.msra.mxu0 %v79
    %262 = vmatprep.subr.mxu0 %v84
    %263 = vmatpush1.msra.mxu0 %v83
    %264 = vmatprep.subr.mxu0 %v88
    %265 = vmatpush1.msra.mxu0 %v87
    %266 = vmatprep.subr.mxu0 %v92
    %267 = vmatpush1.msra.mxu0 %v91
    %268 = vmatprep.subr.mxu0 %v96
    %269 = vmatpush1.msra.mxu0 %v95
    %270 = vmatprep.subr.mxu0 %v100
    %271 = vmatpush1.msra.mxu0 %v99
    %272 = vmatprep.subr.mxu0 %v104
    %273 = vmatpush1.msra.mxu0 %v103
    %274 = vmatprep.subr.mxu0 %v108
    %275 = vmatpush1.msra.mxu0 %v107
    %276 = vmatprep.subr.mxu0 %v112
    %277 = vmatpush1.msra.mxu0 %v111
    %278 = vmatprep.subr.mxu0 %v116
    %279 = vmatpush1.msra.mxu0 %v115
    %280 = vmatprep.subr.mxu0 %v120
    %281 = vmatpush1.msra.mxu0 %v119
    %282 = vmatprep.subr.mxu0 %v124
    %283 = vmatpush1.msra.mxu0 %v123
    %284 = vmatprep.subr.mxu0 %v128
    %285 = vmatpush1.msra.mxu0 %v127
    %286 = vmatprep.subr.mxu0 %v132
    %287 = vmatpush1.msra.mxu0 %v131
    %288 = vmatprep.subr.mxu0 %v136
    %289 = vmatpush1.msra.mxu0 %v135
    %290 = vmatprep.subr.mxu0 %v140
    %291 = vmatpush1.msra.mxu0 %v139
    %292 = vmatprep.subr.mxu0 %v144
    %293 = vmatpush1.msra.mxu0 %v143
    %294 = vmatprep.subr.mxu0 %v148
    %295 = vmatpush1.msra.mxu0 %v147
    %296 = vmatprep.subr.mxu0 %v152
    %297 = vmatpush1.msra.mxu0 %v151
    %298 = vmatprep.subr.mxu0 0.0
    %299 = vmatpush1.msra.mxu0 0.0
    %300 = vmatprep.subr.mxu0 0.0
    %301 = vmatpush1.msra.mxu0 0.0
    %302 = vmatprep.subr.mxu0 0.0
    %303 = vmatpush1.msra.mxu0 0.0
    %304 = vmatprep.subr.mxu0 0.0
    %305 = vmatpush1.msra.mxu0 0.0
    %306 = vmatprep.subr.mxu0 0.0
    %307 = vmatpush1.msra.mxu0 0.0
    %308 = vmatprep.subr.mxu0 0.0
    %309 = vmatpush1.msra.mxu0 0.0
    %310 = vmatprep.subr.mxu0 0.0
    %311 = vmatpush1.msra.mxu0 0.0
    %312 = vmatprep.subr.mxu0 0.0
    %313 = vmatpush1.msra.mxu0 0.0
    %314 = vmatprep.mubr.f32.mxu0 %v177
    %315 = vmatmul.mubr.f32.gmra.mrb[0].mxu0 %v55
    %v316 = vpop.f32.mrb[0].mxu0
    %v317 = vadd.f32 %v166, %v316
    %v318 = vpop.f32.mrb[0].mxu0
    %v319 = vadd.f32 %v170, %v318
    %320 = vdwg.mxu0
    %v321 = vld [vmem:[#allocation5] sm:$0xff]
    %v322 = vld [vmem:[#allocation5 + $0x8] sm:$0xff]
    %v323 = vld [vmem:[#allocation5 + $0x10] sm:$0xff]
    %v324 = vadd.f32 %v248, %v322
    %v325 = vmax.f32 %v324, %v246
    %v326 = vsub.f32 %v246, %v325
    %v327 = vmul.f32 %v326, 1.442695
    %v328 = vpow.pop %v327
    %v329 = vsub.f32 %v248, %v325
    %v330 = vadd.f32 %v329, %v322
    %v331 = vmul.f32 %v330, 1.442695
    %v332 = vpow.pop %v331
    %v333 = vtanh.pop %v317
    %v334 = vxor.u32 %v319, 2147483648
    %v335 = vmul.f32 %v334, 1.442695
    %v336 = vpow.pop %v335
    %v337 = vadd.f32 %v336, 1.0
    %v338 = vrcp.pop %v337
    %v339 = vmul.f32 1.0, %v338
    %v340 = vmul.f32 %v332, %v321
    %v341 = vmul.f32 %v328, %v333
    %v342 = vadd.f32 %v340, %v341
    %v343 = vmul.f32 %v332, %v323
    %v344 = vadd.f32 %v343, %v328
    %v345 = vmul.f32 %v339, %v342
    %v346 = vrcp.pop %v344
    %v347 = vmul.f32 %v345, %v346
    %348 = vst [vmem:[#allocation8] sm:$0xff] %v347
    %349 = vst [vmem:[#allocation8 + $0x8] sm:$0xff] %v342
    %350 = vst [vmem:[#allocation8 + $0x10] sm:$0xff] %v325
    %351 = vst [vmem:[#allocation8 + $0x18] sm:$0xff] %v344
    // Predicated region
    $region30: #{tpu_custom_call.1} parent=1 // pred_check
      _
    $region31: #{tpu_custom_call.1} parent=1 // pred_check_branch
      %353 = sbr.rel (0) target = $region33
    $region32: #{tpu_custom_call.1} parent=1 // pred_region
      %s355 = ssub.s32 512, 512
      %356 = vsyncadd [#allocation4], %s355
      %s358 = sshll.u32 [#allocation8], 4
      %s359 = int_to_ptr.vmem [resolvable:$true] %s358
      %361 = dma.vmem_to_hbm [thread:$0]  %s359, 512, %s4, [#allocation4]
    $region33: #{tpu_custom_call.1} parent=1 // pred_fallthru
      _
    // Predicated region
    $region34: #{tpu_custom_call.1} parent=1 // pred_check
      _
    $region35: #{tpu_custom_call.1} parent=1 // pred_check_branch
      %363 = sbr.rel (0) target = $region37
    $region36: #{tpu_custom_call.1} parent=1 // pred_region
      %364 = dma.done [#allocation4], 512
    $region37: #{tpu_custom_call.1} parent=1 // pred_fallthru
      _
    %365 = vsyncpa [#allocation3], 1
    %366 = vsyncpa [#allocation6], 1
    %367 = vsyncpa [#allocation4], 1

</llo_original>
